<compile_context>
chip_gen: v6e
topology: v6e:2x2x1
jax: 0.10.0
libtpu: 0.0.40
codegen_flags: <defaults>
</compile_context>

<pallas_src>
import functools

import jax
import jax.numpy as jnp
from jax.experimental import pallas as pl
from jax.experimental.pallas import tpu as pltpu

LANES = 128
SUBLANES = 8
CHUNK_ROWS = 256   # 256 x 128 x 4B = 128 KiB f32 per input slice inside the tile loop


def _round_up(x, m):
    return ((x + m - 1) // m) * m


def _chip_config():
    """Returns (num_shards, target_tile_bytes) for the local TPU generation."""
    try:
        kind = jax.devices()[0].device_kind.lower()
    except Exception:
        kind = ""
    if "v7" in kind:
        # 2 TensorCores per chip: shard the reduction across both.
        # TODO(synk): verify in a trace that "parallel" splits the leading grid
        # axis across both TCs; switch to pltpu.CORE_PARALLEL if it does not.
        return 2, 4 << 20
    if "v6" in kind:
        return 1, 4 << 20
    # v5e and older: single TC, smaller tiles are already >90% of roofline.
    return 1, 2 << 20


def _accumulate_chunks(pred_ref, target_ref, acc_i_ref, acc_s_ref,
                       n_chunks, chunk_rows):
    """Accumulate `n_chunks` full chunks (static count), starting at row 0."""
    groups = chunk_rows // SUBLANES

    def chunk_partial(row0):
        p = pred_ref[pl.ds(row0, chunk_rows), :].astype(jnp.float32)
        t = target_ref[pl.ds(row0, chunk_rows), :].astype(jnp.float32)
        pi = jnp.sum((p * t).reshape(groups, SUBLANES, LANES), axis=0)
        ps = jnp.sum((p + t).reshape(groups, SUBLANES, LANES), axis=0)
        return pi, ps

    if n_chunks == 0:
        return
    if n_chunks == 1:
        pi, ps = chunk_partial(0)
        acc_i_ref[...] += pi
        acc_s_ref[...] += ps
        return

    def body(g, carry):
        ci, cs = carry
        row0 = pl.multiple_of(g * chunk_rows, chunk_rows)
        pi, ps = chunk_partial(row0)
        return ci + pi, cs + ps

    zero = jnp.zeros((SUBLANES, LANES), jnp.float32)
    ci, cs = jax.lax.fori_loop(0, n_chunks, body, (zero, zero))
    acc_i_ref[...] += ci
    acc_s_ref[...] += cs


def _dice_partial_kernel(pred_ref, target_ref, out_ref, acc_i_ref, acc_s_ref, *,
                         tile_rows, chunk_rows, tiles_per_shard, num_blocks,
                         ragged_rows, has_dummy):
    c = pl.program_id(0)            # shard (TensorCore) index
    i = pl.program_id(1)            # tile index within this shard (reduction axis)
    tile_id = c * tiles_per_shard + i

    @pl.when(i == 0)
    def _init():
        acc_i_ref[...] = jnp.zeros_like(acc_i_ref)
        acc_s_ref[...] = jnp.zeros_like(acc_s_ref)

    n_chunks = tile_rows // chunk_rows
    has_ragged = ragged_rows > 0
    num_full = num_blocks - 1 if has_ragged else num_blocks

    # -------- fast path: fully populated tiles, no masking at all --------
    def full_tile():
        _accumulate_chunks(pred_ref, target_ref, acc_i_ref, acc_s_ref,
                           n_chunks, chunk_rows)

    if has_ragged or has_dummy:
        if num_full > 0:
            pl.when(tile_id < num_full)(full_tile)
    else:
        full_tile()                 # common case: no guard emitted at all

    # -------- slow path: only the single ragged (last) tile --------------
    if has_ragged:
        def ragged_tile():
            full_chunks = ragged_rows // chunk_rows
            rem_rows = ragged_rows - full_chunks * chunk_rows
            _accumulate_chunks(pred_ref, target_ref, acc_i_ref, acc_s_ref,
                               full_chunks, chunk_rows)
            if rem_rows > 0:
                row0 = full_chunks * chunk_rows   # static
                p = pred_ref[pl.ds(row0, chunk_rows), :].astype(jnp.float32)
                t = target_ref[pl.ds(row0, chunk_rows), :].astype(jnp.float32)
                valid = (jax.lax.broadcasted_iota(
                    jnp.int32, (chunk_rows, LANES), 0) < rem_rows)
                # Mask inputs BEFORE the multiply so OOB garbage (possibly
                # NaN/Inf) can never leak through NaN*0.
                p = jnp.where(valid, p, 0.0)
                t = jnp.where(valid, t, 0.0)
                groups = chunk_rows // SUBLANES
                acc_i_ref[...] += jnp.sum(
                    (p * t).reshape(groups, SUBLANES, LANES), axis=0)
                acc_s_ref[...] += jnp.sum(
                    (p + t).reshape(groups, SUBLANES, LANES), axis=0)

        pl.when(tile_id == num_blocks - 1)(ragged_tile)

    # Dummy tiles (tile_id >= num_blocks, only when has_dummy) hit neither
    # branch: their clamped DMA is wasted but they contribute nothing.

    @pl.when(i == tiles_per_shard - 1)
    def _finalize():
        # Lane-dense (8,128) partials per shard; the tiny reduction to scalars
        # happens in the wrapper.
        out_ref[0, 0] = acc_i_ref[...]
        out_ref[0, 1] = acc_s_ref[...]


def dice_loss(pred, target, smooth=1.0):
    """Pallas TPU implementation of DiceLoss.forward (returns scalar f32)."""
    assert pred.shape == target.shape
    n = pred.size
    if n == 0:
        return jnp.float32(0.0)     # dice = smooth/smooth = 1 -> loss 0

    num_shards, tile_bytes = _chip_config()

    pred_flat = pred.reshape(-1)    # metadata-only reshape for contiguous input
    targ_flat = target.reshape(-1)
    if n % LANES != 0:
        # TODO(synk): non-lane-divisible inputs pay one zero-pad copy (<=127
        # padding elements); lane-divisible inputs (common case) are copy-free.
        pad = LANES - n % LANES
        pred_flat = jnp.pad(pred_flat, (0, pad))
        targ_flat = jnp.pad(targ_flat, (0, pad))

    rows_total = pred_flat.size // LANES
    pred2d = pred_flat.reshape(rows_total, LANES)
    targ2d = targ_flat.reshape(rows_total, LANES)

    # Tile size scaled by dtype so each input block stays ~tile_bytes.
    itemsize = max(jnp.dtype(pred2d.dtype).itemsize, jnp.dtype(targ2d.dtype).itemsize)
    max_tile_rows = max(SUBLANES,
                        (tile_bytes // (LANES * itemsize)) // SUBLANES * SUBLANES)
    tile_rows = min(max_tile_rows, _round_up(rows_total, SUBLANES))

    chunk_rows = min(CHUNK_ROWS, tile_rows)
    while tile_rows % chunk_rows:
        chunk_rows -= SUBLANES      # stays a multiple of 8; terminates at 8

    num_blocks = -(-rows_total // tile_rows)
    num_shards = min(num_shards, num_blocks)
    tiles_per_shard = -(-num_blocks // num_shards)
    has_dummy = num_shards * tiles_per_shard != num_blocks
    ragged_rows = rows_total % tile_rows   # 0 -> last block is full

    last_block = num_blocks - 1
    if has_dummy:
        # Clamp logically-out-of-range tiles onto the last valid block; the
        # kernel skips all compute for them.
        def idx_map(c, i):
            return (jnp.minimum(c * tiles_per_shard + i, last_block), 0)
    else:
        def idx_map(c, i):
            return (c * tiles_per_shard + i, 0)

    kernel = functools.partial(
        _dice_partial_kernel,
        tile_rows=tile_rows,
        chunk_rows=chunk_rows,
        tiles_per_shard=tiles_per_shard,
        num_blocks=num_blocks,
        ragged_rows=ragged_rows,
        has_dummy=has_dummy,
    )

    partials = pl.pallas_call(
        kernel,
        out_shape=jax.ShapeDtypeStruct((num_shards, 2, SUBLANES, LANES), jnp.float32),
        grid_spec=pltpu.PrefetchScalarGridSpec(
            num_scalar_prefetch=0,
            grid=(num_shards, tiles_per_shard),
            in_specs=[
                pl.BlockSpec((tile_rows, LANES), idx_map),
                pl.BlockSpec((tile_rows, LANES), idx_map),
            ],
            out_specs=pl.BlockSpec((1, 2, SUBLANES, LANES),
                                   lambda c, i: (c, 0, 0, 0)),
            scratch_shapes=[
                pltpu.VMEM((SUBLANES, LANES), jnp.float32),
                pltpu.VMEM((SUBLANES, LANES), jnp.float32),
            ],
        ),
        compiler_params=pltpu.CompilerParams(
            dimension_semantics=("parallel", "arbitrary"),
            vmem_limit_bytes=32 << 20,
        ),
    )(pred2d, targ2d)

    # Tiny epilogue: fold the per-shard (8,128) partials into the dice formula.
    intersection = jnp.sum(partials[:, 0])
    total = jnp.sum(partials[:, 1])
    dice = (2.0 * intersection + smooth) / (total + smooth)
    return 1.0 - dice


def dice_loss_ref(pred, target, smooth=1.0):
    pred = pred.astype(jnp.float32)
    target = target.astype(jnp.float32)
    intersection = jnp.sum(pred * target)
    dice = (2.0 * intersection + smooth) / (jnp.sum(pred) + jnp.sum(target) + smooth)
    return 1.0 - dice


if __name__ == "__main__":
    key = jax.random.PRNGKey(0)
    k1, k2 = jax.random.split(key)

    # pred ~ sigmoid outputs in [0,1], target ~ binary mask; NCHW [2, 4, 16, 16]
    pred = jax.nn.sigmoid(jax.random.normal(k1, (2, 4, 16, 16), dtype=jnp.float32))
    target = (jax.random.uniform(k2, (2, 4, 16, 16)) > 0.5).astype(jnp.float32)

    loss = jax.block_until_ready(dice_loss(pred, target, smooth=1.0))
    ref = jax.block_until_ready(dice_loss_ref(pred, target, smooth=1.0))

    assert jnp.allclose(loss, ref, rtol=1e-5, atol=1e-6), (loss, ref)
    print("KERNEL_OK")
</pallas_src>

<mosaic_0001>
module attributes {stable_mosaic.version = 11 : i64} {
  func.func @_dice_partial_kernel(%arg0: i32, %arg1: i32, %arg2: memref<16x128xf32, #tpu.memory_space<vmem>>, %arg3: memref<16x128xf32, #tpu.memory_space<vmem>>, %arg4: memref<1x2x8x128xf32, #tpu.memory_space<vmem>>, %arg5: memref<8x128xf32, #tpu.memory_space<vmem>>, %arg6: memref<8x128xf32, #tpu.memory_space<vmem>>) attributes {dimension_semantics = [#tpu.dimension_semantics<parallel>, #tpu.dimension_semantics<arbitrary>], iteration_bounds = array<i64: 1, 1>, scalar_prefetch = 0 : i64, scratch_operands = 2 : i64, tpu.core_type = #tpu.core_type<tc>, window_params = [{transform_indices = @transform_0, window_bounds = array<i64: 16, 128>}, {transform_indices = @transform_1, window_bounds = array<i64: 16, 128>}, {transform_indices = @transform_2, window_bounds = array<i64: 1, 2, 8, 128>}]} {
    %c0_i32 = arith.constant 0 : i32
    %0 = arith.cmpi eq, %arg1, %c0_i32 : i32
    %1 = arith.extui %0 : i1 to i32
    %c0_i32_0 = arith.constant 0 : i32
    %2 = arith.cmpi ne, %1, %c0_i32_0 : i32
    scf.if %2 {
      %cst_15 = arith.constant 0.000000e+00 : f32
      %20 = vector.broadcast %cst_15 : f32 to vector<8x128xf32>
      %c0_16 = arith.constant 0 : index
      %c0_17 = arith.constant 0 : index
      %21 = vector.load %arg5[%c0_16, %c0_17] : memref<8x128xf32, #tpu.memory_space<vmem>>, vector<8x128xf32>
      tpu.vector_store %arg5[%c0_16, %c0_17], %20 {strides = array<i32>} : memref<8x128xf32, #tpu.memory_space<vmem>>, vector<8x128xf32>,
      %cst_18 = arith.constant 0.000000e+00 : f32
      %22 = vector.broadcast %cst_18 : f32 to vector<8x128xf32>
      %c0_19 = arith.constant 0 : index
      %c0_20 = arith.constant 0 : index
      %23 = vector.load %arg6[%c0_19, %c0_20] : memref<8x128xf32, #tpu.memory_space<vmem>>, vector<8x128xf32>
      tpu.vector_store %arg6[%c0_19, %c0_20], %22 {strides = array<i32>} : memref<8x128xf32, #tpu.memory_space<vmem>>, vector<8x128xf32>,
    } else {
    }
    %c0 = arith.constant 0 : index
    %c0_1 = arith.constant 0 : index
    %3 = vector.load %arg2[%c0, %c0_1] : memref<16x128xf32, #tpu.memory_space<vmem>>, vector<16x128xf32>
    %c0_2 = arith.constant 0 : index
    %c0_3 = arith.constant 0 : index
    %4 = vector.load %arg3[%c0_2, %c0_3] : memref<16x128xf32, #tpu.memory_space<vmem>>, vector<16x128xf32>
    %5 = arith.mulf %3, %4 : vector<16x128xf32>
    %6 = vector.shape_cast %5 : vector<16x128xf32> to vector<2x8x128xf32>
    %cst = arith.constant dense<0.000000e+00> : vector<8x128xf32>
    %7 = vector.multi_reduction <add>, %6, %cst [0] : vector<2x8x128xf32> to vector<8x128xf32>
    %8 = arith.addf %3, %4 : vector<16x128xf32>
    %9 = vector.shape_cast %8 : vector<16x128xf32> to vector<2x8x128xf32>
    %cst_4 = arith.constant dense<0.000000e+00> : vector<8x128xf32>
    %10 = vector.multi_reduction <add>, %9, %cst_4 [0] : vector<2x8x128xf32> to vector<8x128xf32>
    %c0_5 = arith.constant 0 : index
    %c0_6 = arith.constant 0 : index
    %11 = vector.load %arg5[%c0_5, %c0_6] : memref<8x128xf32, #tpu.memory_space<vmem>>, vector<8x128xf32>
    %12 = arith.addf %11, %7 : vector<8x128xf32>
    %c0_7 = arith.constant 0 : index
    %c0_8 = arith.constant 0 : index
    %13 = vector.load %arg5[%c0_7, %c0_8] : memref<8x128xf32, #tpu.memory_space<vmem>>, vector<8x128xf32>
    tpu.vector_store %arg5[%c0_7, %c0_8], %12 {strides = array<i32>} : memref<8x128xf32, #tpu.memory_space<vmem>>, vector<8x128xf32>,
    %c0_9 = arith.constant 0 : index
    %c0_10 = arith.constant 0 : index
    %14 = vector.load %arg6[%c0_9, %c0_10] : memref<8x128xf32, #tpu.memory_space<vmem>>, vector<8x128xf32>
    %15 = arith.addf %14, %10 : vector<8x128xf32>
    %c0_11 = arith.constant 0 : index
    %c0_12 = arith.constant 0 : index
    %16 = vector.load %arg6[%c0_11, %c0_12] : memref<8x128xf32, #tpu.memory_space<vmem>>, vector<8x128xf32>
    tpu.vector_store %arg6[%c0_11, %c0_12], %15 {strides = array<i32>} : memref<8x128xf32, #tpu.memory_space<vmem>>, vector<8x128xf32>,
    %c0_i32_13 = arith.constant 0 : i32
    %17 = arith.cmpi eq, %arg1, %c0_i32_13 : i32
    %18 = arith.extui %17 : i1 to i32
    %c0_i32_14 = arith.constant 0 : i32
    %19 = arith.cmpi ne, %18, %c0_i32_14 : i32
    scf.if %19 {
      %c0_15 = arith.constant 0 : index
      %c0_16 = arith.constant 0 : index
      %20 = vector.load %arg5[%c0_15, %c0_16] : memref<8x128xf32, #tpu.memory_space<vmem>>, vector<8x128xf32>
      %c0_17 = arith.constant 0 : index
      %c0_18 = arith.constant 0 : index
      %c0_19 = arith.constant 0 : index
      %c0_20 = arith.constant 0 : index
      %21 = vector.load %arg4[%c0_17, %c0_18, %c0_19, %c0_20] : memref<1x2x8x128xf32, #tpu.memory_space<vmem>>, vector<1x1x8x128xf32>
      %22 = vector.shape_cast %21 : vector<1x1x8x128xf32> to vector<8x128xf32>
      %23 = vector.shape_cast %20 : vector<8x128xf32> to vector<1x1x8x128xf32>
      tpu.vector_store %arg4[%c0_17, %c0_18, %c0_19, %c0_20], %23 {strides = array<i32>} : memref<1x2x8x128xf32, #tpu.memory_space<vmem>>, vector<1x1x8x128xf32>,
      %c0_21 = arith.constant 0 : index
      %c0_22 = arith.constant 0 : index
      %24 = vector.load %arg6[%c0_21, %c0_22] : memref<8x128xf32, #tpu.memory_space<vmem>>, vector<8x128xf32>
      %c0_23 = arith.constant 0 : index
      %c1 = arith.constant 1 : index
      %c0_24 = arith.constant 0 : index
      %c0_25 = arith.constant 0 : index
      %25 = vector.load %arg4[%c0_23, %c1, %c0_24, %c0_25] : memref<1x2x8x128xf32, #tpu.memory_space<vmem>>, vector<1x1x8x128xf32>
      %26 = vector.shape_cast %25 : vector<1x1x8x128xf32> to vector<8x128xf32>
      %27 = vector.shape_cast %24 : vector<8x128xf32> to vector<1x1x8x128xf32>
      tpu.vector_store %arg4[%c0_23, %c1, %c0_24, %c0_25], %27 {strides = array<i32>} : memref<1x2x8x128xf32, #tpu.memory_space<vmem>>, vector<1x1x8x128xf32>,
    } else {
    }
    return
  }
  func.func @transform_0(%arg0: i32, %arg1: i32) -> (i32, i32) {
    %c1_i32 = arith.constant 1 : i32
    %0 = arith.muli %arg0, %c1_i32 : i32
    %1 = arith.addi %0, %arg1 : i32
    %c0_i32 = arith.constant 0 : i32
    %c0_i32_0 = arith.constant 0 : i32
    return %1, %c0_i32 : i32, i32
  }
  func.func @transform_1(%arg0: i32, %arg1: i32) -> (i32, i32) {
    %c1_i32 = arith.constant 1 : i32
    %0 = arith.muli %arg0, %c1_i32 : i32
    %1 = arith.addi %0, %arg1 : i32
    %c0_i32 = arith.constant 0 : i32
    %c0_i32_0 = arith.constant 0 : i32
    return %1, %c0_i32 : i32, i32
  }
  func.func @transform_2(%arg0: i32, %arg1: i32) -> (i32, i32, i32, i32) {
    %c0_i32 = arith.constant 0 : i32
    %c0_i32_0 = arith.constant 0 : i32
    %c0_i32_1 = arith.constant 0 : i32
    %c0_i32_2 = arith.constant 0 : i32
    return %arg0, %c0_i32, %c0_i32_0, %c0_i32_1 : i32, i32, i32, i32
  }
}

</mosaic_0001>

<llo_original>
// kernel: tpu_custom_call.1
$region0: #{tpu_custom_call.1}
  #allocation0 [shape = 'u32[]', space=smem, size = 0x4, offset = 0x4, fixed_abs, tag = 'smem constant byte address 0x4 - core index']
  #allocation1 [shape = 'u32[144,128]{1,0:T(1,128)}', space=vmem, size = 0x12000, scoped, tag = 'internal scratch']
  #allocation2 [shape = 'f32[8,128]{1,0:T(8,128)}', space=vmem, size = 0x1000, scoped, tag = 'scratch operand']
  #allocation3 [shape = 'f32[8,128]{1,0:T(8,128)}', space=vmem, size = 0x1000, scoped, tag = 'scratch operand']
  %s0 = inlined_call_operand.hbm [shape: f32[16,128], index: 0, kind: input, shape index: {}]
  %s1 = inlined_call_operand.hbm [shape: f32[16,128], index: 1, kind: input, shape index: {}]
  %s2 = inlined_call_operand.hbm [shape: f32[1,2,8,128], index: 2, kind: output, shape index: {}]
  %s3 = sld [smem:[#allocation0]]
  $region34: #{tpu_custom_call.1} parent=0
    _
  %s5 = ssub.s32 1, %s3
  %s6 = scalar_select 0, %s5, %s3
  $region1: #{tpu_custom_call.1} parent=0
    #allocation4 [shape = 'u8[8192]{0}', space=vmem, size = 0x2000, scoped, tag = 'input window, operand 0, single buffered']
    #allocation5 [shape = 's32[1]{0}', space=sflag, size = 0x4, scoped, tag = 'scoped memory for tpu_custom_call.1']
    #allocation6 [shape = 's32[1]{0}', space=sflag, size = 0x4, scoped, tag = 'scoped memory for tpu_custom_call.1']
    #allocation7 [shape = 'u8[8192]{0}', space=vmem, size = 0x2000, scoped, tag = 'input window, operand 1, single buffered']
    #allocation8 [shape = 's32[1]{0}', space=sflag, size = 0x4, scoped, tag = 'scoped memory for tpu_custom_call.1']
    #allocation9 [shape = 'u8[8192]{0}', space=vmem, size = 0x2000, scoped, tag = 'output window, operand 0, single buffered']
    %7 = vsyncpa [#allocation5], 0
    %8 = vsyncpa [#allocation8], 0
    %9 = vsyncpa [#allocation6], 0
    // Predicated region
    $region2: #{tpu_custom_call.1} parent=1 // pred_check
      _
    $region3: #{tpu_custom_call.1} parent=1 // pred_check_branch
      %11 = sbr.rel (0) target = $region5
    $region4: #{tpu_custom_call.1} parent=1 // pred_region
      %s12 = sadd.s32 0, 0
      %s13 = smul.u32 2, %s12
      %s15 = ssub.s32 256, 256
      %16 = vsyncadd [#allocation5], %s15
      %s17 = smul.addr %s13, 128
      %s18 = scalar_lea.hbm %s0, %s17
      %s19 = sshll.u32 [#allocation4], 4
      %s20 = int_to_ptr.vmem [resolvable:$true] %s19
      %25 = dma.hbm_to_vmem [thread:$0]  %s18, 256, %s20, [#allocation5], 128, 128, 8
    $region5: #{tpu_custom_call.1} parent=1 // pred_fallthru
      _
    // Predicated region
    $region6: #{tpu_custom_call.1} parent=1 // pred_check
      _
    $region7: #{tpu_custom_call.1} parent=1 // pred_check_branch
      %27 = sbr.rel (0) target = $region9
    $region8: #{tpu_custom_call.1} parent=1 // pred_region
      %s28 = sadd.s32 0, 0
      %s29 = smul.u32 2, %s28
      %s31 = ssub.s32 256, 256
      %32 = vsyncadd [#allocation8], %s31
      %s33 = smul.addr %s29, 128
      %s34 = scalar_lea.hbm %s1, %s33
      %s35 = sshll.u32 [#allocation7], 4
      %s36 = int_to_ptr.vmem [resolvable:$true] %s35
      %41 = dma.hbm_to_vmem [thread:$0]  %s34, 256, %s36, [#allocation8], 128, 128, 8
    $region9: #{tpu_custom_call.1} parent=1 // pred_fallthru
      _
    // Predicated region
    $region10: #{tpu_custom_call.1} parent=1 // pred_check
      _
    $region11: #{tpu_custom_call.1} parent=1 // pred_check_branch
      %43 = sbr.rel (0) target = $region13
    $region12: #{tpu_custom_call.1} parent=1 // pred_region
      %44 = dma.done [#allocation5], 256
    $region13: #{tpu_custom_call.1} parent=1 // pred_fallthru
      _
    // Predicated region
    $region14: #{tpu_custom_call.1} parent=1 // pred_check
      _
    $region15: #{tpu_custom_call.1} parent=1 // pred_check_branch
      %46 = sbr.rel (0) target = $region17
    $region16: #{tpu_custom_call.1} parent=1 // pred_region
      %47 = dma.done [#allocation8], 256
    $region17: #{tpu_custom_call.1} parent=1 // pred_fallthru
      _
    %s48 = sadd.s32 0, 0
    %s49 = smul.u32 2, %s48
    %s50 = sadd.s32 0, 0
    %s51 = smul.u32 2, %s50
    %p52 = scmp.eq.s32.totalorder 0, 0
    // Predicated region
    $region18: #{tpu_custom_call.1} parent=1 // pred_check
      %p53 = pneg %p52
    $region19: #{tpu_custom_call.1} parent=1 // pred_check_branch
      %55 = sbr.rel (%p53) target = $region21
    $region20: #{tpu_custom_call.1} parent=1 // pred_region
      %56 = vst [vmem:[#allocation2] sm:$0xff] 0.0
      %57 = vst [vmem:[#allocation3] sm:$0xff] 0.0
    $region21: #{tpu_custom_call.1} parent=1 // pred_fallthru
      _
    %v58 = vld [vmem:[#allocation4] sm:$0xff]
    %v59 = vld [vmem:[#allocation4 + $0x8] sm:$0xff]
    %v60 = vld [vmem:[#allocation7] sm:$0xff]
    %v61 = vld [vmem:[#allocation7 + $0x8] sm:$0xff]
    %v62 = vmul.f32 %v58, %v60
    %v63 = vmul.f32 %v59, %v61
    %v64 = vadd.f32 %v62, %v63
    %v65 = vadd.f32 %v58, %v60
    %v66 = vadd.f32 %v59, %v61
    %v67 = vadd.f32 %v65, %v66
    %v68 = vld [vmem:[#allocation2] sm:$0xff]
    %v69 = vadd.f32 %v68, %v64
    %70 = vst [vmem:[#allocation2] sm:$0xff] %v69
    %v71 = vld [vmem:[#allocation3] sm:$0xff]
    %v72 = vadd.f32 %v71, %v67
    %73 = vst [vmem:[#allocation3] sm:$0xff] %v72
    // Predicated region
    $region22: #{tpu_custom_call.1} parent=1 // pred_check
      %p74 = pneg %p52
    $region23: #{tpu_custom_call.1} parent=1 // pred_check_branch
      %76 = sbr.rel (%p74) target = $region25
    $region24: #{tpu_custom_call.1} parent=1 // pred_region
      %v77 = vld [vmem:[#allocation2] sm:$0xff]
      %78 = vst [vmem:[#allocation9] sm:$0xff] %v77
      %v79 = vld [vmem:[#allocation3] sm:$0xff]
      %s80 = scalar_lea.vmem [#allocation9], 8
      %81 = vst [vmem:[%s80] sm:$0xff] %v79
    $region25: #{tpu_custom_call.1} parent=1 // pred_fallthru
      _
    // Predicated region
    $region26: #{tpu_custom_call.1} parent=1 // pred_check
      _
    $region27: #{tpu_custom_call.1} parent=1 // pred_check_branch
      %83 = sbr.rel (0) target = $region29
    $region28: #{tpu_custom_call.1} parent=1 // pred_region
      %s85 = ssub.s32 256, 256
      %86 = vsyncadd [#allocation6], %s85
      %s87 = sshll.u32 [#allocation9], 4
      %s88 = int_to_ptr.vmem [resolvable:$true] %s87
      %93 = dma.vmem_to_hbm [thread:$0]  %s88, 256, %s2, [#allocation6], 128, 128, 8
    $region29: #{tpu_custom_call.1} parent=1 // pred_fallthru
      _
    // Predicated region
    $region30: #{tpu_custom_call.1} parent=1 // pred_check
      _
    $region31: #{tpu_custom_call.1} parent=1 // pred_check_branch
      %95 = sbr.rel (0) target = $region33
    $region32: #{tpu_custom_call.1} parent=1 // pred_region
      %96 = dma.done [#allocation6], 256
    $region33: #{tpu_custom_call.1} parent=1 // pred_fallthru
      _
    %97 = vsyncpa [#allocation5], 1
    %98 = vsyncpa [#allocation8], 1
    %99 = vsyncpa [#allocation6], 1

</llo_original>
